<compile_context>
chip_gen: v5e
topology: v5e:2x2
jax: 0.10.0
libtpu: 0.0.40
codegen_flags: <defaults>
</compile_context>

<pallas_src>
import functools
import math

import jax
import jax.numpy as jnp
from jax import lax
from jax.experimental import pallas as pl
from jax.experimental.pallas import tpu as pltpu

_MIB = 1024 * 1024


def _vmem_budget_bytes() -> int:
    """Generation-aware scoped-VMEM cap (v7x only has 64 MiB physical VMEM)."""
    try:
        cap = int(getattr(pltpu.get_tpu_info(), "vmem_capacity_bytes", 128 * _MIB))
    except Exception:  # not on a TPU / interpret mode
        cap = 128 * _MIB
    return 40 * _MIB if cap <= 64 * _MIB else 64 * _MIB


def _clamp_vmem(estimate_bytes: int) -> int:
    return int(min(max(2 * estimate_bytes, 32 * _MIB), _vmem_budget_bytes()))


def _gelu_tanh(x):
    # TODO(synk): torch.nn.functional.gelu defaults to the exact erf form; the
    # tanh approximation (~1e-3 deviation) is used because erf has no
    # guaranteed Mosaic lowering.
    c = math.sqrt(2.0 / math.pi)
    return 0.5 * x * (1.0 + jnp.tanh(c * (x + 0.044715 * x * x * x)))


def _ln(x, w, b):
    # torch-style LayerNorm used by the module: unbiased std (N-1), NO epsilon.
    # Note: constant rows would produce inf/NaN exactly as the torch module
    # would; ragged-tail garbage rows are row-local and masked on write.
    d = x.shape[-1]
    mu = jnp.mean(x, axis=-1, keepdims=True)
    xc = x - mu
    var = jnp.sum(xc * xc, axis=-1, keepdims=True) * (1.0 / (d - 1))
    return xc * lax.rsqrt(var) * w + b


# --------------------------------------------------------------------------
# Standalone LayerNorm (only used as the large-d_model fallback before unembed)
# --------------------------------------------------------------------------
def _layernorm_kernel(x_ref, g_ref, b_ref, o_ref):
    x = x_ref[...].astype(jnp.float32)
    y = _ln(x, g_ref[...].astype(jnp.float32), b_ref[...].astype(jnp.float32))
    o_ref[...] = y.astype(o_ref.dtype)


def layernorm(x, weight, bias, *, tm=1024):
    batch, pos, d_model = x.shape
    M = batch * pos
    tm = M if M <= tm else tm
    x2 = x.reshape(M, d_model)
    out = pl.pallas_call(
        _layernorm_kernel,
        out_shape=jax.ShapeDtypeStruct((M, d_model), x.dtype),
        grid_spec=pltpu.PrefetchScalarGridSpec(
            num_scalar_prefetch=0,
            grid=(pl.cdiv(M, tm),),
            in_specs=[
                pl.BlockSpec((tm, d_model), lambda i: (i, 0)),
                pl.BlockSpec((1, d_model), lambda i: (0, 0)),
                pl.BlockSpec((1, d_model), lambda i: (0, 0)),
            ],
            out_specs=pl.BlockSpec((tm, d_model), lambda i: (i, 0)),
        ),
        compiler_params=pltpu.CompilerParams(dimension_semantics=("parallel",)),
    )(x2, weight.reshape(1, d_model), bias.reshape(1, d_model))
    return out.reshape(batch, pos, d_model)


# --------------------------------------------------------------------------
# Fused [LN1 -> causal MHA -> +residual] block
# --------------------------------------------------------------------------
def _attention_kernel(xf_ref, xq_ref, lnw_ref, lnb_ref, wq_ref, bq_ref,
                      wkv_ref, bkv_ref, wo_ref, bo_ref, o_ref,
                      *, n_heads, d_head):
    qi = pl.program_id(1)
    xf = xf_ref[0].astype(jnp.float32)          # (pos, d_model) residual input
    xq = xq_ref[0].astype(jnp.float32)          # (tq,  d_model) query-row tile
    pos = xf.shape[0]
    tq = xq.shape[0]
    H = n_heads * d_head
    scale = 1.0 / math.sqrt(d_head)

    lnw = lnw_ref[...].astype(jnp.float32)
    lnb = lnb_ref[...].astype(jnp.float32)

    # Fused LayerNorm (ln1); MXU operands go in as bf16 with f32 accumulation
    # (single MXU pass instead of 3-6 "highest"-precision f32 passes).
    xf_n = _ln(xf, lnw, lnb).astype(jnp.bfloat16)
    xq_n = _ln(xq, lnw, lnb).astype(jnp.bfloat16)

    # Fused projections: one (d_model, H) matmul for Q on the query tile and a
    # single (d_model, 2H) matmul producing K|V for the whole sequence.
    q = jnp.dot(xq_n, wq_ref[...], preferred_element_type=jnp.float32) + bq_ref[...]
    kv = jnp.dot(xf_n, wkv_ref[...], preferred_element_type=jnp.float32) + bkv_ref[...]
    k = kv[:, :H]
    v = kv[:, H:]

    row = lax.broadcasted_iota(jnp.int32, (tq, pos), 0) + qi * tq
    col = lax.broadcasted_iota(jnp.int32, (tq, pos), 1)
    causal = col > row                                   # strictly-upper masked

    # Per-head scores / AV with static lane slices of the fused Q/K/V; only one
    # head's small intermediates are live at a time.
    # TODO(synk): at real head counts use a batched-over-heads dot_general (or a
    # flash-style kv-tiled kernel) instead of this short static loop.
    ctx_parts = []
    for h in range(n_heads):
        sl = slice(h * d_head, (h + 1) * d_head)
        qh = q[:, sl].astype(jnp.bfloat16)
        kh = k[:, sl].astype(jnp.bfloat16)
        vh = v[:, sl].astype(jnp.bfloat16)
        logits = lax.dot_general(qh, kh, (((1,), (1,)), ((), ())),
                                 preferred_element_type=jnp.float32) * scale
        logits = jnp.where(causal, -100000.0, logits)    # matches masked_fill_
        m = jnp.max(logits, axis=-1, keepdims=True)
        p = jnp.exp(logits - m)
        p = p * pl.reciprocal(jnp.sum(p, axis=-1, keepdims=True), approx=True)
        ctx_parts.append(jnp.dot(p.astype(jnp.bfloat16), vh,
                                 preferred_element_type=jnp.float32))

    # Concatenate heads, then a single fused (H, d_model) output projection.
    ctx = jnp.concatenate(ctx_parts, axis=-1)            # (tq, H)
    out = jnp.dot(ctx.astype(jnp.bfloat16), wo_ref[...],
                  preferred_element_type=jnp.float32) + bo_ref[...]

    # Fold the residual add: kernel output is x + Attention(LN1(x)).
    o_ref[0] = (xq + out).astype(o_ref.dtype)


def attention_block(x, ln_w, ln_b, Q_w, Q_b, K_w, K_b, V_w, V_b, O_w, O_b,
                    *, weight_dtype=jnp.bfloat16):
    """Returns residual_attn = x + Attention(LayerNorm(x))   (LN/residual fused)."""
    batch, pos, d_model = x.shape
    n_heads, _, d_head = Q_w.shape
    H = n_heads * d_head
    wd = weight_dtype if weight_dtype is not None else x.dtype

    # Per-head weights fused to MXU-friendly shapes (no 16-wide matmuls).
    wq = jnp.transpose(Q_w, (1, 0, 2)).reshape(d_model, H).astype(wd)
    wk = jnp.transpose(K_w, (1, 0, 2)).reshape(d_model, H).astype(wd)
    wv = jnp.transpose(V_w, (1, 0, 2)).reshape(d_model, H).astype(wd)
    wkv = jnp.concatenate([wk, wv], axis=1)              # (d_model, 2H)
    wo = O_w.reshape(H, d_model).astype(wd)
    bq = Q_b.reshape(1, H).astype(jnp.float32)
    bkv = jnp.concatenate([K_b.reshape(1, H), V_b.reshape(1, H)],
                          axis=1).astype(jnp.float32)
    bo = O_b.reshape(1, d_model).astype(jnp.float32)
    lnw = ln_w.reshape(1, d_model)
    lnb = ln_b.reshape(1, d_model)

    # Query-row tiling gives the grid more than `batch` parallel steps so both
    # v7x TensorCores stay busy; K/V use the whole sequence per step.
    # TODO(synk): long contexts need a flash-style kv-tiled kernel; the
    # whole-sequence (pos, pos) logits bound this version to short contexts.
    tq = pos if pos <= 256 else 256
    n_q = pl.cdiv(pos, tq)

    wbytes = (wq.size + wkv.size + wo.size) * jnp.dtype(wd).itemsize
    abytes = (pos * d_model + 2 * tq * d_model) * 4
    ibytes = (pos * 3 * H + 2 * tq * pos + 2 * tq * H) * 4
    vmem_limit = _clamp_vmem(2 * (wbytes + abytes) + ibytes)

    return pl.pallas_call(
        functools.partial(_attention_kernel, n_heads=n_heads, d_head=d_head),
        out_shape=jax.ShapeDtypeStruct((batch, pos, d_model), x.dtype),
        grid_spec=pltpu.PrefetchScalarGridSpec(
            num_scalar_prefetch=0,
            grid=(batch, n_q),
            in_specs=[
                pl.BlockSpec((1, pos, d_model), lambda b, i: (b, 0, 0)),
                pl.BlockSpec((1, tq, d_model), lambda b, i: (b, i, 0)),
                pl.BlockSpec((1, d_model), lambda b, i: (0, 0)),
                pl.BlockSpec((1, d_model), lambda b, i: (0, 0)),
                # TODO(synk): on v7x with large d_model, mark these constant
                # weight blocks pipeline_mode=pl.Buffered(1) (or K-tile them) so
                # they are not double-buffered in 64 MiB VMEM.
                pl.BlockSpec((d_model, H), lambda b, i: (0, 0)),
                pl.BlockSpec((1, H), lambda b, i: (0, 0)),
                pl.BlockSpec((d_model, 2 * H), lambda b, i: (0, 0)),
                pl.BlockSpec((1, 2 * H), lambda b, i: (0, 0)),
                pl.BlockSpec((H, d_model), lambda b, i: (0, 0)),
                pl.BlockSpec((1, d_model), lambda b, i: (0, 0)),
            ],
            out_specs=pl.BlockSpec((1, tq, d_model), lambda b, i: (b, i, 0)),
        ),
        compiler_params=pltpu.CompilerParams(
            dimension_semantics=("parallel", "parallel"),
            vmem_limit_bytes=vmem_limit),
    )(x, x, lnw, lnb, wq, bq, wkv, bkv, wo, bo)


# --------------------------------------------------------------------------
# Fused [LN2 -> MLP -> + x + residual_attn] block
# --------------------------------------------------------------------------
def _mlp_kernel(x_ref, ra_ref, lnw_ref, lnb_ref, wi_ref, bi_ref,
                wo_ref, bo_ref, o_ref):
    x = x_ref[...].astype(jnp.float32)
    ra = ra_ref[...].astype(jnp.float32)
    lnw = lnw_ref[...].astype(jnp.float32)
    lnb = lnb_ref[...].astype(jnp.float32)

    ra_n = _ln(ra, lnw, lnb).astype(jnp.bfloat16)
    h = jnp.dot(ra_n, wi_ref[...], preferred_element_type=jnp.float32) + bi_ref[...]
    h = _gelu_tanh(h)
    y = jnp.dot(h.astype(jnp.bfloat16), wo_ref[...],
                preferred_element_type=jnp.float32) + bo_ref[...]
    # Fold both residual adds: out = x + residual_attn + MLP(LN2(residual_attn)).
    o_ref[...] = (x + ra + y).astype(o_ref.dtype)


def mlp_block(x, residual_attn, ln_w, ln_b, In_w, In_b, Out_w, Out_b,
              *, tm=512, weight_dtype=jnp.bfloat16):
    batch, pos, d_model = x.shape
    d_mlp = In_w.shape[1]
    M = batch * pos
    tm = M if M <= tm else tm            # ragged tail handled by Pallas masking
    wd = weight_dtype if weight_dtype is not None else x.dtype

    wi = In_w.astype(wd)
    wo = Out_w.astype(wd)
    bi = In_b.reshape(1, d_mlp).astype(jnp.float32)
    bo = Out_b.reshape(1, d_model).astype(jnp.float32)
    x2 = x.reshape(M, d_model)
    ra2 = residual_attn.reshape(M, d_model)

    wbytes = (wi.size + wo.size) * jnp.dtype(wd).itemsize
    abytes = 3 * tm * d_model * 4 + 2 * tm * d_mlp * 4
    vmem_limit = _clamp_vmem(2 * wbytes + 2 * abytes)

    out = pl.pallas_call(
        _mlp_kernel,
        out_shape=jax.ShapeDtypeStruct((M, d_model), x.dtype),
        grid_spec=pltpu.PrefetchScalarGridSpec(
            num_scalar_prefetch=0,
            grid=(pl.cdiv(M, tm),),
            in_specs=[
                pl.BlockSpec((tm, d_model), lambda i: (i, 0)),
                pl.BlockSpec((tm, d_model), lambda i: (i, 0)),
                pl.BlockSpec((1, d_model), lambda i: (0, 0)),
                pl.BlockSpec((1, d_model), lambda i: (0, 0)),
                # TODO(synk): for large d_model*d_mlp on v7x, K-tile d_mlp with
                # an accumulator (like the unembed kernel) or Buffered(1) these.
                pl.BlockSpec((d_model, d_mlp), lambda i: (0, 0)),
                pl.BlockSpec((1, d_mlp), lambda i: (0, 0)),
                pl.BlockSpec((d_mlp, d_model), lambda i: (0, 0)),
                pl.BlockSpec((1, d_model), lambda i: (0, 0)),
            ],
            out_specs=pl.BlockSpec((tm, d_model), lambda i: (i, 0)),
        ),
        compiler_params=pltpu.CompilerParams(
            dimension_semantics=("parallel",),
            vmem_limit_bytes=vmem_limit),
    )(x2, ra2, ln_w.reshape(1, d_model), ln_b.reshape(1, d_model), wi, bi, wo, bo)
    return out.reshape(batch, pos, d_model)


# --------------------------------------------------------------------------
# Unembedding (optionally with the final LayerNorm fused into the prologue)
# --------------------------------------------------------------------------
def _unembed_kernel(x_ref, lnw_ref, lnb_ref, w_ref, b_ref, o_ref, acc_ref,
                    *, apply_ln):
    k = pl.program_id(2)

    @pl.when(k == 0)
    def _init():
        acc_ref[...] = jnp.zeros_like(acc_ref)

    x = x_ref[...]
    if apply_ln:   # only used when the K axis is a single whole-d_model block
        x = _ln(x.astype(jnp.float32),
                lnw_ref[...].astype(jnp.float32),
                lnb_ref[...].astype(jnp.float32))
    x = x.astype(w_ref.dtype)
    acc_ref[...] += jnp.dot(x, w_ref[...], preferred_element_type=jnp.float32)

    @pl.when(k == pl.num_programs(2) - 1)
    def _finalize():
        o_ref[...] = (acc_ref[...] + b_ref[...].astype(jnp.float32)).astype(o_ref.dtype)


def unembedding_block(x, ln_w, ln_b, U_w, U_b, *, tm=None, tn=None,
                      weight_dtype=jnp.bfloat16, out_dtype=None):
    """logits = LayerNorm(x) @ U_w + U_b, streamed with bf16 weights by default."""
    batch, pos, d_model = x.shape
    d_model_w, d_vocab = U_w.shape
    assert d_model == d_model_w
    out_dtype = x.dtype if out_dtype is None else out_dtype
    M = batch * pos

    wd = weight_dtype if weight_dtype is not None else x.dtype
    w = U_w.astype(wd)
    b = U_b.reshape(1, d_vocab).astype(jnp.float32)
    w_item = jnp.dtype(wd).itemsize
    out_item = jnp.dtype(out_dtype).itemsize
    small_vmem = _vmem_budget_bytes() <= 40 * _MIB

    # K axis: keep d_model whole when it fits (enables the fused final LN);
    # otherwise pre-normalize with the standalone LN kernel and K-tile.
    if d_model <= 2048:
        tk, apply_ln = d_model, True
        x2 = x.reshape(M, d_model)
    else:
        tk = next((t for t in (2048, 1024, 512, 256) if d_model % t == 0), d_model)
        apply_ln = False
        x2 = layernorm(x, ln_w, ln_b).reshape(M, d_model).astype(wd)

    if tm is None:
        tm = 512
    tm = M if M <= tm else tm
    if tn is None:
        tn = 2048 if (small_vmem or w_item >= 4) else 4096   # lane-dense output
    tn = d_vocab if d_vocab <= tn else tn

    # Grid order (vocab, rows, k): with a single K block the W tile stays
    # resident across the inner row axis, so W streams from HBM exactly once.
    grid = (pl.cdiv(d_vocab, tn), pl.cdiv(M, tm), pl.cdiv(d_model, tk))

    x_item = jnp.dtype(x2.dtype).itemsize
    est = (2 * (tm * tk * x_item + tk * tn * w_item + tn * 4)
           + 2 * tm * tn * out_item + tm * tn * 4)
    vmem_limit = _clamp_vmem(est)

    cost = pl.CostEstimate(
        flops=2 * M * d_model * d_vocab,
        transcendentals=0,
        bytes_accessed=(M * d_model * x_item + d_model * d_vocab * w_item
                        + d_vocab * 4 + M * d_vocab * out_item),
    )

    out = pl.pallas_call(
        functools.partial(_unembed_kernel, apply_ln=apply_ln),
        out_shape=jax.ShapeDtypeStruct((M, d_vocab), out_dtype),
        grid_spec=pltpu.PrefetchScalarGridSpec(
            num_scalar_prefetch=0,
            grid=grid,
            in_specs=[
                pl.BlockSpec((tm, tk), lambda j, i, k: (i, k)),
                pl.BlockSpec((1, d_model), lambda j, i, k: (0, 0)),
                pl.BlockSpec((1, d_model), lambda j, i, k: (0, 0)),
                pl.BlockSpec((tk, tn), lambda j, i, k: (k, j)),
                pl.BlockSpec((1, tn), lambda j, i, k: (0, j)),
            ],
            out_specs=pl.BlockSpec((tm, tn), lambda j, i, k: (i, j)),
            scratch_shapes=[pltpu.VMEM((tm, tn), jnp.float32)],
        ),
        compiler_params=pltpu.CompilerParams(
            dimension_semantics=("parallel", "parallel", "arbitrary"),
            vmem_limit_bytes=vmem_limit),
        cost_estimate=cost,
    )(x2, ln_w.reshape(1, d_model), ln_b.reshape(1, d_model), w, b)
    return out.reshape(batch, pos, d_vocab)


# --------------------------------------------------------------------------
# Full forward pass
# --------------------------------------------------------------------------
def transformer_forward(params, tokens):
    batch, pos = tokens.shape
    # TODO(synk): the vocabulary gather is data-dependent indexing; kept in
    # plain JAX (a Pallas DMA-gather only pays off at very large vocab/d_model).
    residual = jnp.take(params["E_w"], tokens, axis=0) + params["P_w"][:pos][None, :, :]

    for blk in params["blocks"]:
        x = residual
        # residual_attn = x + Attention(LN1(x))                (fully fused)
        residual_attn = attention_block(
            x, blk["ln1_w"], blk["ln1_b"], blk["Q_w"], blk["Q_b"],
            blk["K_w"], blk["K_b"], blk["V_w"], blk["V_b"],
            blk["O_w"], blk["O_b"])
        # residual = x + residual_attn + MLP(LN2(residual_attn))  (fully fused)
        residual = mlp_block(
            x, residual_attn, blk["ln2_w"], blk["ln2_b"],
            blk["In_w"], blk["In_b"], blk["Out_w"], blk["Out_b"])

    # Final LayerNorm is fused into the unembedding kernel prologue.
    return unembedding_block(residual, params["ln_w"], params["ln_b"],
                             params["U_w"], params["U_b"])


# --------------------------------------------------------------------------
# Deterministic parameter init (xavier-normal weights, small-random biases)
# --------------------------------------------------------------------------
def init_transformer_params(key, *, n_blocks, n_heads, d_head, d_model, d_mlp,
                            d_vocab, context_length, dtype=jnp.float32):
    keys = iter(jax.random.split(key, 3 + 12 * n_blocks))

    def xavier(shape):
        fan_in, fan_out = shape[-2], shape[-1]
        std = math.sqrt(2.0 / (fan_in + fan_out))
        return (std * jax.random.normal(next(keys), shape)).astype(dtype)

    def bias(shape):
        # torch leaves these uninitialized (torch.empty); use small random
        # values so the bias paths are exercised by the numerical check.
        return (0.1 * jax.random.normal(next(keys), shape)).astype(dtype)

    params = {
        "E_w": xavier((d_vocab, d_model)),
        "P_w": xavier((context_length, d_model)),
        "U_w": xavier((d_model, d_vocab)),
        "U_b": jnp.zeros((d_vocab,), dtype),
        "ln_w": jnp.ones((d_model,), dtype),
        "ln_b": jnp.zeros((d_model,), dtype),
        "blocks": [],
    }
    for _ in range(n_blocks):
        params["blocks"].append({
            "ln1_w": jnp.ones((d_model,), dtype), "ln1_b": jnp.zeros((d_model,), dtype),
            "Q_w": xavier((n_heads, d_model, d_head)), "Q_b": bias((n_heads, d_head)),
            "K_w": xavier((n_heads, d_model, d_head)), "K_b": bias((n_heads, d_head)),
            "V_w": xavier((n_heads, d_model, d_head)), "V_b": bias((n_heads, d_head)),
            "O_w": xavier((n_heads, d_head, d_model)), "O_b": bias((d_model,)),
            "ln2_w": jnp.ones((d_model,), dtype), "ln2_b": jnp.zeros((d_model,), dtype),
            "In_w": xavier((d_model, d_mlp)), "In_b": bias((d_mlp,)),
            "Out_w": xavier((d_mlp, d_model)), "Out_b": bias((d_model,)),
        })
    return params


# --------------------------------------------------------------------------
# Pure-JAX reference (same math as the PyTorch module, f32 "highest" matmuls)
# --------------------------------------------------------------------------
def _reference_forward(params, tokens):
    pos = tokens.shape[1]
    hp = lax.Precision.HIGHEST
    residual = params["E_w"][tokens] + params["P_w"][:pos][None, :, :]

    def ln(x, w, b):
        mu = x.mean(-1, keepdims=True)
        sd = jnp.std(x, axis=-1, keepdims=True, ddof=1)
        return w * ((x - mu) / sd) + b

    for blk in params["blocks"]:
        x = residual
        xn = ln(x, blk["ln1_w"], blk["ln1_b"])
        d_head = blk["Q_w"].shape[-1]
        q = jnp.einsum("bpd,hdk->bphk", xn, blk["Q_w"], precision=hp) + blk["Q_b"]
        k = jnp.einsum("bpd,hdk->bphk", xn, blk["K_w"], precision=hp) + blk["K_b"]
        v = jnp.einsum("bpd,hdk->bphk", xn, blk["V_w"], precision=hp) + blk["V_b"]
        logits = jnp.einsum("bqhk,bshk->bhqs", q, k, precision=hp) / math.sqrt(d_head)
        mask = jnp.triu(jnp.ones((pos, pos), dtype=bool), k=1)
        logits = jnp.where(mask, -100000.0, logits)
        scores = jax.nn.softmax(logits, axis=-1)
        attn = jnp.einsum("bhqs,bshk->bqhk", scores, v, precision=hp)
        attn_out = jnp.einsum("bqhk,hkd->bqd", attn, blk["O_w"], precision=hp) + blk["O_b"]
        residual_attn = x + attn_out
        xn2 = ln(residual_attn, blk["ln2_w"], blk["ln2_b"])
        h = _gelu_tanh(jnp.einsum("bpd,dm->bpm", xn2, blk["In_w"], precision=hp)
                       + blk["In_b"])
        mlp_out = jnp.einsum("bpm,md->bpd", h, blk["Out_w"], precision=hp) + blk["Out_b"]
        residual = x + residual_attn + mlp_out

    residual = ln(residual, params["ln_w"], params["ln_b"])
    return jnp.einsum("bpd,dv->bpv", residual, params["U_w"], precision=hp) + params["U_b"]


if __name__ == "__main__":
    n_blocks, n_heads, d_head, d_model, d_mlp = 2, 2, 16, 32, 128
    d_vocab, context_length = 128, 16
    batch, seq = 2, 8

    key = jax.random.PRNGKey(0)
    k_params, k_tok = jax.random.split(key)
    params = init_transformer_params(
        k_params, n_blocks=n_blocks, n_heads=n_heads, d_head=d_head,
        d_model=d_model, d_mlp=d_mlp, d_vocab=d_vocab,
        context_length=context_length)
    tokens = jax.random.randint(k_tok, (batch, seq), 0, d_vocab, dtype=jnp.int32)

    logits = jax.block_until_ready(transformer_forward(params, tokens))
    ref = _reference_forward(params, tokens)

    assert logits.shape == (batch, seq, d_vocab)
    # Tolerance accounts for bf16 MXU operands (f32 accumulation) in the Pallas
    # kernels vs. the f32 "highest"-precision reference.
    err = float(jnp.max(jnp.abs(logits - ref)))
    assert jnp.allclose(logits, ref, atol=4e-2, rtol=4e-2), err
    print("KERNEL_OK")
</pallas_src>

<mosaic_0001>
module attributes {stable_mosaic.version = 11 : i64} {
  func.func @_attention_kernel(%arg0: i32, %arg1: i32, %arg2: memref<1x8x32xf32, #tpu.memory_space<vmem>>, %arg3: memref<1x8x32xf32, #tpu.memory_space<vmem>>, %arg4: memref<1x32xf32, #tpu.memory_space<vmem>>, %arg5: memref<1x32xf32, #tpu.memory_space<vmem>>, %arg6: memref<32x32xbf16, #tpu.memory_space<vmem>>, %arg7: memref<1x32xf32, #tpu.memory_space<vmem>>, %arg8: memref<32x64xbf16, #tpu.memory_space<vmem>>, %arg9: memref<1x64xf32, #tpu.memory_space<vmem>>, %arg10: memref<32x32xbf16, #tpu.memory_space<vmem>>, %arg11: memref<1x32xf32, #tpu.memory_space<vmem>>, %arg12: memref<1x8x32xf32, #tpu.memory_space<vmem>>) attributes {dimension_semantics = [#tpu.dimension_semantics<parallel>, #tpu.dimension_semantics<parallel>], iteration_bounds = array<i64: 2, 1>, scalar_prefetch = 0 : i64, scratch_operands = 0 : i64, tpu.core_type = #tpu.core_type<tc>, window_params = [{transform_indices = @transform_0, window_bounds = array<i64: 1, 8, 32>}, {transform_indices = @transform_1, window_bounds = array<i64: 1, 8, 32>}, {pipeline_mode = #tpu.pipeline_mode<synchronous>, transform_indices = @transform_2, window_bounds = array<i64: 1, 32>}, {pipeline_mode = #tpu.pipeline_mode<synchronous>, transform_indices = @transform_3, window_bounds = array<i64: 1, 32>}, {pipeline_mode = #tpu.pipeline_mode<synchronous>, transform_indices = @transform_4, window_bounds = array<i64: 32, 32>}, {pipeline_mode = #tpu.pipeline_mode<synchronous>, transform_indices = @transform_5, window_bounds = array<i64: 1, 32>}, {pipeline_mode = #tpu.pipeline_mode<synchronous>, transform_indices = @transform_6, window_bounds = array<i64: 32, 64>}, {pipeline_mode = #tpu.pipeline_mode<synchronous>, transform_indices = @transform_7, window_bounds = array<i64: 1, 64>}, {pipeline_mode = #tpu.pipeline_mode<synchronous>, transform_indices = @transform_8, window_bounds = array<i64: 32, 32>}, {pipeline_mode = #tpu.pipeline_mode<synchronous>, transform_indices = @transform_9, window_bounds = array<i64: 1, 32>}, {transform_indices = @transform_10, window_bounds = array<i64: 1, 8, 32>}]} {
    %c0 = arith.constant 0 : index
    %c0_0 = arith.constant 0 : index
    %c0_1 = arith.constant 0 : index
    %0 = vector.load %arg2[%c0, %c0_0, %c0_1] : memref<1x8x32xf32, #tpu.memory_space<vmem>>, vector<1x8x32xf32>
    %1 = vector.shape_cast %0 : vector<1x8x32xf32> to vector<8x32xf32>
    %c0_2 = arith.constant 0 : index
    %c0_3 = arith.constant 0 : index
    %c0_4 = arith.constant 0 : index
    %2 = vector.load %arg3[%c0_2, %c0_3, %c0_4] : memref<1x8x32xf32, #tpu.memory_space<vmem>>, vector<1x8x32xf32>
    %3 = vector.shape_cast %2 : vector<1x8x32xf32> to vector<8x32xf32>
    %c0_5 = arith.constant 0 : index
    %c0_6 = arith.constant 0 : index
    %4 = vector.load %arg4[%c0_5, %c0_6] : memref<1x32xf32, #tpu.memory_space<vmem>>, vector<1x32xf32>
    %c0_7 = arith.constant 0 : index
    %c0_8 = arith.constant 0 : index
    %5 = vector.load %arg5[%c0_7, %c0_8] : memref<1x32xf32, #tpu.memory_space<vmem>>, vector<1x32xf32>
    %cst = arith.constant dense<0.000000e+00> : vector<8xf32>
    %6 = vector.multi_reduction <add>, %1, %cst [1] : vector<8x32xf32> to vector<8xf32>
    %7 = vector.shape_cast %6 : vector<8xf32> to vector<8x1xf32>
    %cst_9 = arith.constant 3.200000e+01 : f32
    %8 = vector.broadcast %cst_9 : f32 to vector<8x1xf32>
    %9 = arith.divf %7, %8 : vector<8x1xf32>
    %10 = vector.broadcast %9 : vector<8x1xf32> to vector<8x32xf32>
    %11 = arith.subf %1, %10 : vector<8x32xf32>
    %12 = arith.mulf %11, %11 : vector<8x32xf32>
    %cst_10 = arith.constant dense<0.000000e+00> : vector<8xf32>
    %13 = vector.multi_reduction <add>, %12, %cst_10 [1] : vector<8x32xf32> to vector<8xf32>
    %14 = vector.shape_cast %13 : vector<8xf32> to vector<8x1xf32>
    %cst_11 = arith.constant 0.0322580636 : f32
    %15 = vector.broadcast %cst_11 : f32 to vector<8x1xf32>
    %16 = arith.mulf %14, %15 : vector<8x1xf32>
    %17 = math.rsqrt %16 : vector<8x1xf32>
    %18 = vector.broadcast %17 : vector<8x1xf32> to vector<8x32xf32>
    %19 = arith.mulf %11, %18 : vector<8x32xf32>
    %20 = vector.broadcast %4 : vector<1x32xf32> to vector<8x32xf32>
    %21 = arith.mulf %19, %20 : vector<8x32xf32>
    %22 = vector.broadcast %5 : vector<1x32xf32> to vector<8x32xf32>
    %23 = arith.addf %21, %22 : vector<8x32xf32>
    %24 = arith.truncf %23 : vector<8x32xf32> to vector<8x32xbf16>
    %cst_12 = arith.constant dense<0.000000e+00> : vector<8xf32>
    %25 = vector.multi_reduction <add>, %3, %cst_12 [1] : vector<8x32xf32> to vector<8xf32>
    %26 = vector.shape_cast %25 : vector<8xf32> to vector<8x1xf32>
    %cst_13 = arith.constant 3.200000e+01 : f32
    %27 = vector.broadcast %cst_13 : f32 to vector<8x1xf32>
    %28 = arith.divf %26, %27 : vector<8x1xf32>
    %29 = vector.broadcast %28 : vector<8x1xf32> to vector<8x32xf32>
    %30 = arith.subf %3, %29 : vector<8x32xf32>
    %31 = arith.mulf %30, %30 : vector<8x32xf32>
    %cst_14 = arith.constant dense<0.000000e+00> : vector<8xf32>
    %32 = vector.multi_reduction <add>, %31, %cst_14 [1] : vector<8x32xf32> to vector<8xf32>
    %33 = vector.shape_cast %32 : vector<8xf32> to vector<8x1xf32>
    %cst_15 = arith.constant 0.0322580636 : f32
    %34 = vector.broadcast %cst_15 : f32 to vector<8x1xf32>
    %35 = arith.mulf %33, %34 : vector<8x1xf32>
    %36 = math.rsqrt %35 : vector<8x1xf32>
    %37 = vector.broadcast %36 : vector<8x1xf32> to vector<8x32xf32>
    %38 = arith.mulf %30, %37 : vector<8x32xf32>
    %39 = vector.broadcast %4 : vector<1x32xf32> to vector<8x32xf32>
    %40 = arith.mulf %38, %39 : vector<8x32xf32>
    %41 = vector.broadcast %5 : vector<1x32xf32> to vector<8x32xf32>
    %42 = arith.addf %40, %41 : vector<8x32xf32>
    %43 = arith.truncf %42 : vector<8x32xf32> to vector<8x32xbf16>
    %c0_16 = arith.constant 0 : index
    %c0_17 = arith.constant 0 : index
    %44 = vector.load %arg6[%c0_16, %c0_17] : memref<32x32xbf16, #tpu.memory_space<vmem>>, vector<32x32xbf16>
    %cst_18 = arith.constant dense<0.000000e+00> : vector<8x32xf32>
    %45 = tpu.matmul %43, %44, %cst_18 {dimension_numbers = #tpu.dot_dimension_numbers<[1], [0], [0], [1], [0, 0, 1, 1], [], []>} : vector<8x32xbf16>, vector<32x32xbf16>, vector<8x32xf32> -> vector<8x32xf32>
    %c0_19 = arith.constant 0 : index
    %c0_20 = arith.constant 0 : index
    %46 = vector.load %arg7[%c0_19, %c0_20] : memref<1x32xf32, #tpu.memory_space<vmem>>, vector<1x32xf32>
    %47 = vector.broadcast %46 : vector<1x32xf32> to vector<8x32xf32>
    %48 = arith.addf %45, %47 : vector<8x32xf32>
    %c0_21 = arith.constant 0 : index
    %c0_22 = arith.constant 0 : index
    %49 = vector.load %arg8[%c0_21, %c0_22] : memref<32x64xbf16, #tpu.memory_space<vmem>>, vector<32x64xbf16>
    %cst_23 = arith.constant dense<0.000000e+00> : vector<8x64xf32>
    %50 = tpu.matmul %24, %49, %cst_23 {dimension_numbers = #tpu.dot_dimension_numbers<[1], [0], [0], [1], [0, 0, 1, 1], [], []>} : vector<8x32xbf16>, vector<32x64xbf16>, vector<8x64xf32> -> vector<8x64xf32>
    %c0_24 = arith.constant 0 : index
    %c0_25 = arith.constant 0 : index
    %51 = vector.load %arg9[%c0_24, %c0_25] : memref<1x64xf32, #tpu.memory_space<vmem>>, vector<1x64xf32>
    %52 = vector.broadcast %51 : vector<1x64xf32> to vector<8x64xf32>
    %53 = arith.addf %50, %52 : vector<8x64xf32>
    %54 = vector.extract_strided_slice %53 {offsets = [0, 0], sizes = [8, 32], strides = [1, 1]} : vector<8x64xf32> to vector<8x32xf32>
    %55 = vector.extract_strided_slice %53 {offsets = [0, 32], sizes = [8, 32], strides = [1, 1]} : vector<8x64xf32> to vector<8x32xf32>
    %56 = tpu.iota {dimensions = array<i32: 0>} : vector<8x8xi32>
    %c8_i32 = arith.constant 8 : i32
    %57 = arith.muli %arg1, %c8_i32 : i32
    %58 = vector.broadcast %57 : i32 to vector<8x8xi32>
    %59 = arith.addi %56, %58 : vector<8x8xi32>
    %60 = tpu.iota {dimensions = array<i32: 1>} : vector<8x8xi32>
    %61 = arith.cmpi sgt, %60, %59 : vector<8x8xi32>
    %62 = vector.extract_strided_slice %48 {offsets = [0, 0], sizes = [8, 16], strides = [1, 1]} : vector<8x32xf32> to vector<8x16xf32>
    %63 = arith.truncf %62 : vector<8x16xf32> to vector<8x16xbf16>
    %64 = vector.extract_strided_slice %54 {offsets = [0, 0], sizes = [8, 16], strides = [1, 1]} : vector<8x32xf32> to vector<8x16xf32>
    %65 = arith.truncf %64 : vector<8x16xf32> to vector<8x16xbf16>
    %66 = vector.extract_strided_slice %55 {offsets = [0, 0], sizes = [8, 16], strides = [1, 1]} : vector<8x32xf32> to vector<8x16xf32>
    %67 = arith.truncf %66 : vector<8x16xf32> to vector<8x16xbf16>
    %cst_26 = arith.constant dense<0.000000e+00> : vector<8x8xf32>
    %68 = tpu.matmul %63, %65, %cst_26 {dimension_numbers = #tpu.dot_dimension_numbers<[1], [1], [0], [0], [0, 0, 1, 0], [], []>} : vector<8x16xbf16>, vector<8x16xbf16>, vector<8x8xf32> -> vector<8x8xf32>
    %cst_27 = arith.constant 2.500000e-01 : f32
    %69 = vector.broadcast %cst_27 : f32 to vector<8x8xf32>
    %70 = arith.mulf %68, %69 : vector<8x8xf32>
    %cst_28 = arith.constant -1.000000e+05 : f32
    %71 = vector.broadcast %cst_28 : f32 to vector<8x8xf32>
    %72 = arith.select %61, %71, %70 : vector<8x8xi1>, vector<8x8xf32>
    %cst_29 = arith.constant dense<0xFF800000> : vector<8xf32>
    %73 = vector.multi_reduction <maximumf>, %72, %cst_29 [1] : vector<8x8xf32> to vector<8xf32>
    %74 = vector.shape_cast %73 : vector<8xf32> to vector<8x1xf32>
    %75 = vector.broadcast %74 : vector<8x1xf32> to vector<8x8xf32>
    %76 = arith.subf %72, %75 : vector<8x8xf32>
    %77 = math.exp %76 : vector<8x8xf32>
    %cst_30 = arith.constant dense<0.000000e+00> : vector<8xf32>
    %78 = vector.multi_reduction <add>, %77, %cst_30 [1] : vector<8x8xf32> to vector<8xf32>
    %79 = vector.shape_cast %78 : vector<8xf32> to vector<8x1xf32>
    %80 = tpu.reciprocal %79 {approx = true} : vector<8x1xf32> -> vector<8x1xf32>
    %81 = vector.broadcast %80 : vector<8x1xf32> to vector<8x8xf32>
    %82 = arith.mulf %77, %81 : vector<8x8xf32>
    %83 = arith.truncf %82 : vector<8x8xf32> to vector<8x8xbf16>
    %cst_31 = arith.constant dense<0.000000e+00> : vector<8x16xf32>
    %84 = tpu.matmul %83, %67, %cst_31 {dimension_numbers = #tpu.dot_dimension_numbers<[1], [0], [0], [1], [0, 0, 1, 1], [], []>} : vector<8x8xbf16>, vector<8x16xbf16>, vector<8x16xf32> -> vector<8x16xf32>
    %85 = vector.extract_strided_slice %48 {offsets = [0, 16], sizes = [8, 16], strides = [1, 1]} : vector<8x32xf32> to vector<8x16xf32>
    %86 = arith.truncf %85 : vector<8x16xf32> to vector<8x16xbf16>
    %87 = vector.extract_strided_slice %54 {offsets = [0, 16], sizes = [8, 16], strides = [1, 1]} : vector<8x32xf32> to vector<8x16xf32>
    %88 = arith.truncf %87 : vector<8x16xf32> to vector<8x16xbf16>
    %89 = vector.extract_strided_slice %55 {offsets = [0, 16], sizes = [8, 16], strides = [1, 1]} : vector<8x32xf32> to vector<8x16xf32>
    %90 = arith.truncf %89 : vector<8x16xf32> to vector<8x16xbf16>
    %cst_32 = arith.constant dense<0.000000e+00> : vector<8x8xf32>
    %91 = tpu.matmul %86, %88, %cst_32 {dimension_numbers = #tpu.dot_dimension_numbers<[1], [1], [0], [0], [0, 0, 1, 0], [], []>} : vector<8x16xbf16>, vector<8x16xbf16>, vector<8x8xf32> -> vector<8x8xf32>
    %cst_33 = arith.constant 2.500000e-01 : f32
    %92 = vector.broadcast %cst_33 : f32 to vector<8x8xf32>
    %93 = arith.mulf %91, %92 : vector<8x8xf32>
    %cst_34 = arith.constant -1.000000e+05 : f32
    %94 = vector.broadcast %cst_34 : f32 to vector<8x8xf32>
    %95 = arith.select %61, %94, %93 : vector<8x8xi1>, vector<8x8xf32>
    %cst_35 = arith.constant dense<0xFF800000> : vector<8xf32>
    %96 = vector.multi_reduction <maximumf>, %95, %cst_35 [1] : vector<8x8xf32> to vector<8xf32>
    %97 = vector.shape_cast %96 : vector<8xf32> to vector<8x1xf32>
    %98 = vector.broadcast %97 : vector<8x1xf32> to vector<8x8xf32>
    %99 = arith.subf %95, %98 : vector<8x8xf32>
    %100 = math.exp %99 : vector<8x8xf32>
    %cst_36 = arith.constant dense<0.000000e+00> : vector<8xf32>
    %101 = vector.multi_reduction <add>, %100, %cst_36 [1] : vector<8x8xf32> to vector<8xf32>
    %102 = vector.shape_cast %101 : vector<8xf32> to vector<8x1xf32>
    %103 = tpu.reciprocal %102 {approx = true} : vector<8x1xf32> -> vector<8x1xf32>
    %104 = vector.broadcast %103 : vector<8x1xf32> to vector<8x8xf32>
    %105 = arith.mulf %100, %104 : vector<8x8xf32>
    %106 = arith.truncf %105 : vector<8x8xf32> to vector<8x8xbf16>
    %cst_37 = arith.constant dense<0.000000e+00> : vector<8x16xf32>
    %107 = tpu.matmul %106, %90, %cst_37 {dimension_numbers = #tpu.dot_dimension_numbers<[1], [0], [0], [1], [0, 0, 1, 1], [], []>} : vector<8x8xbf16>, vector<8x16xbf16>, vector<8x16xf32> -> vector<8x16xf32>
    %108 = tpu.concatenate %84, %107 in 1 : vector<8x16xf32>, vector<8x16xf32> -> vector<8x32xf32>
    %109 = arith.truncf %108 : vector<8x32xf32> to vector<8x32xbf16>
    %c0_38 = arith.constant 0 : index
    %c0_39 = arith.constant 0 : index
    %110 = vector.load %arg10[%c0_38, %c0_39] : memref<32x32xbf16, #tpu.memory_space<vmem>>, vector<32x32xbf16>
    %cst_40 = arith.constant dense<0.000000e+00> : vector<8x32xf32>
    %111 = tpu.matmul %109, %110, %cst_40 {dimension_numbers = #tpu.dot_dimension_numbers<[1], [0], [0], [1], [0, 0, 1, 1], [], []>} : vector<8x32xbf16>, vector<32x32xbf16>, vector<8x32xf32> -> vector<8x32xf32>
    %c0_41 = arith.constant 0 : index
    %c0_42 = arith.constant 0 : index
    %112 = vector.load %arg11[%c0_41, %c0_42] : memref<1x32xf32, #tpu.memory_space<vmem>>, vector<1x32xf32>
    %113 = vector.broadcast %112 : vector<1x32xf32> to vector<8x32xf32>
    %114 = arith.addf %111, %113 : vector<8x32xf32>
    %115 = arith.addf %3, %114 : vector<8x32xf32>
    %c0_43 = arith.constant 0 : index
    %c0_44 = arith.constant 0 : index
    %c0_45 = arith.constant 0 : index
    %116 = vector.load %arg12[%c0_43, %c0_44, %c0_45] : memref<1x8x32xf32, #tpu.memory_space<vmem>>, vector<1x8x32xf32>
    %117 = vector.shape_cast %116 : vector<1x8x32xf32> to vector<8x32xf32>
    %118 = vector.shape_cast %115 : vector<8x32xf32> to vector<1x8x32xf32>
    tpu.vector_store %arg12[%c0_43, %c0_44, %c0_45], %118 {strides = array<i32>} : memref<1x8x32xf32, #tpu.memory_space<vmem>>, vector<1x8x32xf32>,
    return
  }
  func.func @transform_0(%arg0: i32, %arg1: i32) -> (i32, i32, i32) {
    %c0_i32 = arith.constant 0 : i32
    %c0_i32_0 = arith.constant 0 : i32
    %c0_i32_1 = arith.constant 0 : i32
    return %arg0, %c0_i32, %c0_i32_0 : i32, i32, i32
  }
  func.func @transform_1(%arg0: i32, %arg1: i32) -> (i32, i32, i32) {
    %c0_i32 = arith.constant 0 : i32
    %c0_i32_0 = arith.constant 0 : i32
    return %arg0, %arg1, %c0_i32 : i32, i32, i32
  }
  func.func @transform_2(%arg0: i32, %arg1: i32) -> (i32, i32) {
    %c0_i32 = arith.constant 0 : i32
    %c0_i32_0 = arith.constant 0 : i32
    %c0_i32_1 = arith.constant 0 : i32
    return %c0_i32, %c0_i32_0 : i32, i32
  }
  func.func @transform_3(%arg0: i32, %arg1: i32) -> (i32, i32) {
    %c0_i32 = arith.constant 0 : i32
    %c0_i32_0 = arith.constant 0 : i32
    %c0_i32_1 = arith.constant 0 : i32
    return %c0_i32, %c0_i32_0 : i32, i32
  }
  func.func @transform_4(%arg0: i32, %arg1: i32) -> (i32, i32) {
    %c0_i32 = arith.constant 0 : i32
    %c0_i32_0 = arith.constant 0 : i32
    %c0_i32_1 = arith.constant 0 : i32
    return %c0_i32, %c0_i32_0 : i32, i32
  }
  func.func @transform_5(%arg0: i32, %arg1: i32) -> (i32, i32) {
    %c0_i32 = arith.constant 0 : i32
    %c0_i32_0 = arith.constant 0 : i32
    %c0_i32_1 = arith.constant 0 : i32
    return %c0_i32, %c0_i32_0 : i32, i32
  }
  func.func @transform_6(%arg0: i32, %arg1: i32) -> (i32, i32) {
    %c0_i32 = arith.constant 0 : i32
    %c0_i32_0 = arith.constant 0 : i32
    %c0_i32_1 = arith.constant 0 : i32
    return %c0_i32, %c0_i32_0 : i32, i32
  }
  func.func @transform_7(%arg0: i32, %arg1: i32) -> (i32, i32) {
    %c0_i32 = arith.constant 0 : i32
    %c0_i32_0 = arith.constant 0 : i32
    %c0_i32_1 = arith.constant 0 : i32
    return %c0_i32, %c0_i32_0 : i32, i32
  }
  func.func @transform_8(%arg0: i32, %arg1: i32) -> (i32, i32) {
    %c0_i32 = arith.constant 0 : i32
    %c0_i32_0 = arith.constant 0 : i32
    %c0_i32_1 = arith.constant 0 : i32
    return %c0_i32, %c0_i32_0 : i32, i32
  }
  func.func @transform_9(%arg0: i32, %arg1: i32) -> (i32, i32) {
    %c0_i32 = arith.constant 0 : i32
    %c0_i32_0 = arith.constant 0 : i32
    %c0_i32_1 = arith.constant 0 : i32
    return %c0_i32, %c0_i32_0 : i32, i32
  }
  func.func @transform_10(%arg0: i32, %arg1: i32) -> (i32, i32, i32) {
    %c0_i32 = arith.constant 0 : i32
    %c0_i32_0 = arith.constant 0 : i32
    return %arg0, %arg1, %c0_i32 : i32, i32, i32
  }
}

</mosaic_0001>

<llo_original>
// kernel: tpu_custom_call.1
$region0: #{tpu_custom_call.1}
  #allocation0 [shape = 'u32[]', space=smem, size = 0x4, offset = 0x4, fixed_abs, tag = 'smem constant byte address 0x4 - core index']
  #allocation1 [shape = 'u32[72,128]{1,0:T(1,128)}', space=vmem, size = 0x9000, scoped, tag = 'internal scratch']
  %s0 = inlined_call_operand.hbm [shape: f32[2,8,32], index: 0, kind: input, shape index: {}]
  %s1 = inlined_call_operand.hbm [shape: f32[2,8,32], index: 1, kind: input, shape index: {}]
  %s2 = inlined_call_operand.vmem [shape: f32[1,32], index: 2, kind: input, shape index: {}]
  %s3 = inlined_call_operand.vmem [shape: f32[1,32], index: 3, kind: input, shape index: {}]
  %s4 = inlined_call_operand.hbm [shape: bf16[32,32], index: 4, kind: input, shape index: {}]
  %s5 = inlined_call_operand.vmem [shape: f32[1,32], index: 5, kind: input, shape index: {}]
  %s6 = inlined_call_operand.hbm [shape: bf16[32,64], index: 6, kind: input, shape index: {}]
  %s7 = inlined_call_operand.vmem [shape: f32[1,64], index: 7, kind: input, shape index: {}]
  %s8 = inlined_call_operand.hbm [shape: bf16[32,32], index: 8, kind: input, shape index: {}]
  %s9 = inlined_call_operand.vmem [shape: f32[1,32], index: 9, kind: input, shape index: {}]
  %s10 = inlined_call_operand.hbm [shape: f32[2,8,32], index: 10, kind: output, shape index: {}]
  %s11 = sld [smem:[#allocation0]]
  $region93: #{tpu_custom_call.1} parent=0
    _
  %s13 = ssub.s32 1, %s11
  %s14 = scalar_select 0, %s13, %s11
  $region1: #{tpu_custom_call.1} parent=0
    #allocation2 [shape = 'u8[8192]{0}', space=vmem, size = 0x2000, scoped, tag = 'input window, operand 0']
    #allocation3 [shape = 's32[2]{0}', space=sflag, size = 0x8, scoped, tag = 'scoped memory for tpu_custom_call.1']
    #allocation4 [shape = 's32[2]{0}', space=sflag, size = 0x8, scoped, tag = 'scoped memory for tpu_custom_call.1']
    #allocation5 [shape = 'u8[8192]{0}', space=vmem, size = 0x2000, scoped, tag = 'input window, operand 1']
    #allocation6 [shape = 's32[2]{0}', space=sflag, size = 0x8, scoped, tag = 'scoped memory for tpu_custom_call.1']
    #allocation7 [shape = 'u8[8192]{0}', space=vmem, size = 0x2000, scoped, tag = 'input window, operand 4, single buffered']
    #allocation8 [shape = 'u8[8192]{0}', space=vmem, size = 0x2000, scoped, tag = 'input window, operand 6, single buffered']
    #allocation9 [shape = 's32[1]{0}', space=sflag, size = 0x4, scoped, tag = 'scoped memory for tpu_custom_call.1']
    #allocation10 [shape = 'u8[8192]{0}', space=vmem, size = 0x2000, scoped, tag = 'input window, operand 8, single buffered']
    #allocation11 [shape = 'u8[8192]{0}', space=vmem, size = 0x2000, scoped, tag = 'output window, operand 0']
    %15 = vsyncpa [#allocation3], 0
    %s16 = scalar_lea.sflag [#allocation3], 1
    %17 = vsyncpa %s16, 0
    %18 = vsyncpa [#allocation6], 0
    %s19 = scalar_lea.sflag [#allocation6], 1
    %20 = vsyncpa %s19, 0
    %21 = vsyncpa [#allocation9], 0
    %22 = vsyncpa [#allocation4], 0
    %s23 = scalar_lea.sflag [#allocation4], 1
    %24 = vsyncpa %s23, 0
    loop: start=0, step=1, limit=4
    $region2: #{tpu_custom_call.1} parent=1 // loop_pre_header
      _
    $region3: #{tpu_custom_call.1} parent=1 // loop_header
      %s26 = sphi 0, %s30
      %p27 = scmp.ge.s32.totalorder %s26, 4
      %s33 = sphi 0, %s45
      %s34 = sphi 0, %s41
      %s35 = sphi 0, %s33
      %s36 = sphi 0, %s34
      %s37 = sphi 0, %s35
      %s38 = sphi 0, %s36
      %s48 = sphi 0, %s50
      %s51 = sphi 0, %s48
      %s52 = sphi 0, %s51
      %s68 = sphi 0, %s52
      %s76 = sphi 0, %s78
      %s79 = sphi 0, %s76
      %s80 = sphi 0, %s79
      %s96 = sphi 0, %s80
      %s100 = sphi 0, %s100
      %s102 = sphi 0, %s100
      %s103 = sphi 0, %s102
      %s117 = sphi 0, %s103
      %s121 = sphi 0, %s121
      %s123 = sphi 0, %s121
      %s124 = sphi 0, %s123
      %s138 = sphi 0, %s124
      %s142 = sphi 0, %s142
      %s144 = sphi 0, %s142
      %s145 = sphi 0, %s144
      %s159 = sphi 0, %s145
      %s163 = sphi 0, %s163
      %s165 = sphi 0, %s163
      %s166 = sphi 0, %s165
      %s180 = sphi 0, %s166
      %s184 = sphi 0, %s184
      %s186 = sphi 0, %s184
      %s187 = sphi 0, %s186
      %s201 = sphi 0, %s187
      %s205 = sphi 0, %s205
      %s207 = sphi 0, %s205
      %s208 = sphi 0, %s207
      %s222 = sphi 0, %s208
      %s226 = sphi 0, %s226
      %s228 = sphi 0, %s226
      %s229 = sphi 0, %s228
      %s243 = sphi 0, %s229
      %s247 = sphi 0, %s247
      %s249 = sphi 0, %s247
      %s250 = sphi 0, %s249
      %s264 = sphi 0, %s250
      %s272 = sphi 0, %s274
      %s275 = sphi 0, %s272
      %s276 = sphi 0, %s275
      %s292 = sphi 0, %s276
    $region4: #{tpu_custom_call.1} parent=1 // loop_header_branch
      %29 = sbr.rel (%p27) target = $region8
    $region5: #{tpu_custom_call.1} parent=1 // loop_body
      %s31 = ssub.s32 %s26, 1
      %s32 = ssub.s32 %s26, 2
      %s39 = sadd.s32 1, %s34
      %p40 = scmp.ge.s32.totalorder %s39, 1
      %s41 = scalar_select %p40, 0, %s39
      %s42 = sadd.s32 1, %s33
      %s43 = scalar_select %p40, %s42, %s33
      %p44 = scmp.ge.s32.totalorder %s43, 2
      %s45 = scalar_select %p44, 0, %s43
      %s46 = ssub.s32 %s33, %s45
      %p47 = scmp.eq.s32.totalorder %s46, 0
      %s49 = sadd.s32 %s48, 1
      %s50 = scalar_select %p47, %s48, %s49
      %p53 = pneg %p47
      %p54 = scmp.eq.s32.totalorder %s26, 1
      %p55 = por %p53, %p54
      %p56 = scmp.ne.s32.totalorder %s48, %s51
      %p57 = scmp.eq.s32.totalorder %s26, 0
      %p58 = por %p56, %p57
      %p59 = scmp.ne.s32.totalorder %s48, %s51
      %p60 = scmp.eq.s32.totalorder %s31, 1
      %p61 = por %p59, %p60
      %p62 = scmp.ne.s32.totalorder %s51, %s52
      %p63 = scmp.eq.s32.totalorder %s31, 0
      %p64 = por %p62, %p63
      %p65 = scmp.ne.s32.totalorder %s51, %s52
      %p66 = scmp.eq.s32.totalorder %s32, 1
      %p67 = por %p65, %p66
      %p69 = scmp.ne.s32.totalorder %s52, %s68
      %p70 = scmp.eq.s32.totalorder %s32, 0
      %p71 = por %p69, %p70
      %s72 = ssub.s32 %s33, %s45
      %s73 = ssub.s32 %s34, %s41
      %s74 = sor.u32 %s72, %s73
      %p75 = scmp.eq.s32.totalorder %s74, 0
      %s77 = sadd.s32 %s76, 1
      %s78 = scalar_select %p75, %s76, %s77
      %p81 = pneg %p75
      %p82 = scmp.eq.s32.totalorder %s26, 1
      %p83 = por %p81, %p82
      %p84 = scmp.ne.s32.totalorder %s76, %s79
      %p85 = scmp.eq.s32.totalorder %s26, 0
      %p86 = por %p84, %p85
      %p87 = scmp.ne.s32.totalorder %s76, %s79
      %p88 = scmp.eq.s32.totalorder %s31, 1
      %p89 = por %p87, %p88
      %p90 = scmp.ne.s32.totalorder %s79, %s80
      %p91 = scmp.eq.s32.totalorder %s31, 0
      %p92 = por %p90, %p91
      %p93 = scmp.ne.s32.totalorder %s79, %s80
      %p94 = scmp.eq.s32.totalorder %s32, 1
      %p95 = por %p93, %p94
      %p97 = scmp.ne.s32.totalorder %s80, %s96
      %p98 = scmp.eq.s32.totalorder %s32, 0
      %p99 = por %p97, %p98
      %s101 = sadd.s32 %s100, 1
      %p104 = scmp.eq.s32.totalorder %s26, 1
      %p105 = scmp.ne.s32.totalorder %s100, %s102
      %p106 = scmp.eq.s32.totalorder %s26, 0
      %p107 = por %p105, %p106
      %p108 = scmp.ne.s32.totalorder %s100, %s102
      %p109 = scmp.eq.s32.totalorder %s31, 1
      %p110 = por %p108, %p109
      %p111 = scmp.ne.s32.totalorder %s102, %s103
      %p112 = scmp.eq.s32.totalorder %s31, 0
      %p113 = por %p111, %p112
      %p114 = scmp.ne.s32.totalorder %s102, %s103
      %p115 = scmp.eq.s32.totalorder %s32, 1
      %p116 = por %p114, %p115
      %p118 = scmp.ne.s32.totalorder %s103, %s117
      %p119 = scmp.eq.s32.totalorder %s32, 0
      %p120 = por %p118, %p119
      %s122 = sadd.s32 %s121, 1
      %p125 = scmp.eq.s32.totalorder %s26, 1
      %p126 = scmp.ne.s32.totalorder %s121, %s123
      %p127 = scmp.eq.s32.totalorder %s26, 0
      %p128 = por %p126, %p127
      %p129 = scmp.ne.s32.totalorder %s121, %s123
      %p130 = scmp.eq.s32.totalorder %s31, 1
      %p131 = por %p129, %p130
      %p132 = scmp.ne.s32.totalorder %s123, %s124
      %p133 = scmp.eq.s32.totalorder %s31, 0
      %p134 = por %p132, %p133
      %p135 = scmp.ne.s32.totalorder %s123, %s124
      %p136 = scmp.eq.s32.totalorder %s32, 1
      %p137 = por %p135, %p136
      %p139 = scmp.ne.s32.totalorder %s124, %s138
      %p140 = scmp.eq.s32.totalorder %s32, 0
      %p141 = por %p139, %p140
      %s143 = sadd.s32 %s142, 1
      %p146 = scmp.eq.s32.totalorder %s26, 1
      %p147 = scmp.ne.s32.totalorder %s142, %s144
      %p148 = scmp.eq.s32.totalorder %s26, 0
      %p149 = por %p147, %p148
      %p150 = scmp.ne.s32.totalorder %s142, %s144
      %p151 = scmp.eq.s32.totalorder %s31, 1
      %p152 = por %p150, %p151
      %p153 = scmp.ne.s32.totalorder %s144, %s145
      %p154 = scmp.eq.s32.totalorder %s31, 0
      %p155 = por %p153, %p154
      %p156 = scmp.ne.s32.totalorder %s144, %s145
      %p157 = scmp.eq.s32.totalorder %s32, 1
      %p158 = por %p156, %p157
      %p160 = scmp.ne.s32.totalorder %s145, %s159
      %p161 = scmp.eq.s32.totalorder %s32, 0
      %p162 = por %p160, %p161
      %s164 = sadd.s32 %s163, 1
      %p167 = scmp.eq.s32.totalorder %s26, 1
      %p168 = scmp.ne.s32.totalorder %s163, %s165
      %p169 = scmp.eq.s32.totalorder %s26, 0
      %p170 = por %p168, %p169
      %p171 = scmp.ne.s32.totalorder %s163, %s165
      %p172 = scmp.eq.s32.totalorder %s31, 1
      %p173 = por %p171, %p172
      %p174 = scmp.ne.s32.totalorder %s165, %s166
      %p175 = scmp.eq.s32.totalorder %s31, 0
      %p176 = por %p174, %p175
      %p177 = scmp.ne.s32.totalorder %s165, %s166
      %p178 = scmp.eq.s32.totalorder %s32, 1
      %p179 = por %p177, %p178
      %p181 = scmp.ne.s32.totalorder %s166, %s180
      %p182 = scmp.eq.s32.totalorder %s32, 0
      %p183 = por %p181, %p182
      %s185 = sadd.s32 %s184, 1
      %p188 = scmp.eq.s32.totalorder %s26, 1
      %p189 = scmp.ne.s32.totalorder %s184, %s186
      %p190 = scmp.eq.s32.totalorder %s26, 0
      %p191 = por %p189, %p190
      %p192 = scmp.ne.s32.totalorder %s184, %s186
      %p193 = scmp.eq.s32.totalorder %s31, 1
      %p194 = por %p192, %p193
      %p195 = scmp.ne.s32.totalorder %s186, %s187
      %p196 = scmp.eq.s32.totalorder %s31, 0
      %p197 = por %p195, %p196
      %p198 = scmp.ne.s32.totalorder %s186, %s187
      %p199 = scmp.eq.s32.totalorder %s32, 1
      %p200 = por %p198, %p199
      %p202 = scmp.ne.s32.totalorder %s187, %s201
      %p203 = scmp.eq.s32.totalorder %s32, 0
      %p204 = por %p202, %p203
      %s206 = sadd.s32 %s205, 1
      %p209 = scmp.eq.s32.totalorder %s26, 1
      %p210 = scmp.ne.s32.totalorder %s205, %s207
      %p211 = scmp.eq.s32.totalorder %s26, 0
      %p212 = por %p210, %p211
      %p213 = scmp.ne.s32.totalorder %s205, %s207
      %p214 = scmp.eq.s32.totalorder %s31, 1
      %p215 = por %p213, %p214
      %p216 = scmp.ne.s32.totalorder %s207, %s208
      %p217 = scmp.eq.s32.totalorder %s31, 0
      %p218 = por %p216, %p217
      %p219 = scmp.ne.s32.totalorder %s207, %s208
      %p220 = scmp.eq.s32.totalorder %s32, 1
      %p221 = por %p219, %p220
      %p223 = scmp.ne.s32.totalorder %s208, %s222
      %p224 = scmp.eq.s32.totalorder %s32, 0
      %p225 = por %p223, %p224
      %s227 = sadd.s32 %s226, 1
      %p230 = scmp.eq.s32.totalorder %s26, 1
      %p231 = scmp.ne.s32.totalorder %s226, %s228
      %p232 = scmp.eq.s32.totalorder %s26, 0
      %p233 = por %p231, %p232
      %p234 = scmp.ne.s32.totalorder %s226, %s228
      %p235 = scmp.eq.s32.totalorder %s31, 1
      %p236 = por %p234, %p235
      %p237 = scmp.ne.s32.totalorder %s228, %s229
      %p238 = scmp.eq.s32.totalorder %s31, 0
      %p239 = por %p237, %p238
      %p240 = scmp.ne.s32.totalorder %s228, %s229
      %p241 = scmp.eq.s32.totalorder %s32, 1
      %p242 = por %p240, %p241
      %p244 = scmp.ne.s32.totalorder %s229, %s243
      %p245 = scmp.eq.s32.totalorder %s32, 0
      %p246 = por %p244, %p245
      %s248 = sadd.s32 %s247, 1
      %p251 = scmp.eq.s32.totalorder %s26, 1
      %p252 = scmp.ne.s32.totalorder %s247, %s249
      %p253 = scmp.eq.s32.totalorder %s26, 0
      %p254 = por %p252, %p253
      %p255 = scmp.ne.s32.totalorder %s247, %s249
      %p256 = scmp.eq.s32.totalorder %s31, 1
      %p257 = por %p255, %p256
      %p258 = scmp.ne.s32.totalorder %s249, %s250
      %p259 = scmp.eq.s32.totalorder %s31, 0
      %p260 = por %p258, %p259
      %p261 = scmp.ne.s32.totalorder %s249, %s250
      %p262 = scmp.eq.s32.totalorder %s32, 1
      %p263 = por %p261, %p262
      %p265 = scmp.ne.s32.totalorder %s250, %s264
      %p266 = scmp.eq.s32.totalorder %s32, 0
      %p267 = por %p265, %p266
      %s268 = ssub.s32 %s33, %s45
      %s269 = ssub.s32 %s34, %s41
      %s270 = sor.u32 %s268, %s269
      %p271 = scmp.eq.s32.totalorder %s270, 0
      %s273 = sadd.s32 %s272, 1
      %s274 = scalar_select %p271, %s272, %s273
      %p277 = pneg %p271
      %p278 = scmp.eq.s32.totalorder %s26, 1
      %p279 = por %p277, %p278
      %p280 = scmp.ne.s32.totalorder %s272, %s275
      %p281 = scmp.eq.s32.totalorder %s26, 0
      %p282 = por %p280, %p281
      %p283 = scmp.ne.s32.totalorder %s272, %s275
      %p284 = scmp.eq.s32.totalorder %s31, 1
      %p285 = por %p283, %p284
      %p286 = scmp.ne.s32.totalorder %s275, %s276
      %p287 = scmp.eq.s32.totalorder %s31, 0
      %p288 = por %p286, %p287
      %p289 = scmp.ne.s32.totalorder %s275, %s276
      %p290 = scmp.eq.s32.totalorder %s32, 1
      %p291 = por %p289, %p290
      %p293 = scmp.ne.s32.totalorder %s276, %s292
      %p294 = scmp.eq.s32.totalorder %s32, 0
      %p295 = por %p293, %p294
      %p296 = scmp.le.s32.totalorder 1, %s26
      %p297 = scmp.lt.s32.totalorder %s26, 3
      %p298 = pnand %p296, %p297
      %p299 = pneg %p298
      // Predicated region
      $region9: #{tpu_custom_call.1} parent=5 // pred_check
        _
      $region10: #{tpu_custom_call.1} parent=5 // pred_check_branch
        %301 = sbr.rel (%p298) target = $region12
      $region11: #{tpu_custom_call.1} parent=5 // pred_region
        %s302 = ssub.s32 %s26, 1
        // Predicated region
        $region13: #{tpu_custom_call.1} parent=11 // pred_check
          %p303 = pneg %p113
        $region14: #{tpu_custom_call.1} parent=11 // pred_check_branch
          %305 = sbr.rel (%p303) target = $region16
        $region15: #{tpu_custom_call.1} parent=11 // pred_region
          _
        $region16: #{tpu_custom_call.1} parent=11 // pred_fallthru
          _
        // Predicated region
        $region17: #{tpu_custom_call.1} parent=11 // pred_check
          %p306 = pneg %p134
        $region18: #{tpu_custom_call.1} parent=11 // pred_check_branch
          %308 = sbr.rel (%p306) target = $region20
        $region19: #{tpu_custom_call.1} parent=11 // pred_region
          _
        $region20: #{tpu_custom_call.1} parent=11 // pred_fallthru
          _
        // Predicated region
        $region21: #{tpu_custom_call.1} parent=11 // pred_check
          %p309 = pneg %p155
        $region22: #{tpu_custom_call.1} parent=11 // pred_check_branch
          %311 = sbr.rel (%p309) target = $region24
        $region23: #{tpu_custom_call.1} parent=11 // pred_region
          %313 = vsyncadd [#allocation6], 0
          %s314 = sshll.u32 %s4, 4
          %s315 = int_to_ptr.hbm [resolvable:$true] %s314
          %s316 = sshll.u32 [#allocation7], 4
          %s317 = int_to_ptr.vmem [resolvable:$true] %s316
          %322 = dma.hbm_to_vmem [thread:$0]  %s315, 256, %s317, [#allocation6], 64, 64, 4
        $region24: #{tpu_custom_call.1} parent=11 // pred_fallthru
          _
        // Predicated region
        $region25: #{tpu_custom_call.1} parent=11 // pred_check
          %p323 = pneg %p176
        $region26: #{tpu_custom_call.1} parent=11 // pred_check_branch
          %325 = sbr.rel (%p323) target = $region28
        $region27: #{tpu_custom_call.1} parent=11 // pred_region
          _
        $region28: #{tpu_custom_call.1} parent=11 // pred_fallthru
          _
        // Predicated region
        $region29: #{tpu_custom_call.1} parent=11 // pred_check
          %p326 = pneg %p197
        $region30: #{tpu_custom_call.1} parent=11 // pred_check_branch
          %328 = sbr.rel (%p326) target = $region32
        $region31: #{tpu_custom_call.1} parent=11 // pred_region
          %330 = vsyncadd [#allocation9], 0
          %s331 = sshll.u32 %s6, 4
          %s332 = int_to_ptr.hbm [resolvable:$true] %s331
          %s333 = sshll.u32 [#allocation8], 4
          %s334 = int_to_ptr.vmem [resolvable:$true] %s333
          %339 = dma.hbm_to_vmem [thread:$0]  %s332, 256, %s334, [#allocation9], 64, 64, 4
        $region32: #{tpu_custom_call.1} parent=11 // pred_fallthru
          _
        // Predicated region
        $region33: #{tpu_custom_call.1} parent=11 // pred_check
          %p340 = pneg %p218
        $region34: #{tpu_custom_call.1} parent=11 // pred_check_branch
          %342 = sbr.rel (%p340) target = $region36
        $region35: #{tpu_custom_call.1} parent=11 // pred_region
          _
        $region36: #{tpu_custom_call.1} parent=11 // pred_fallthru
          _
        // Predicated region
        $region37: #{tpu_custom_call.1} parent=11 // pred_check
          %p343 = pneg %p239
        $region38: #{tpu_custom_call.1} parent=11 // pred_check_branch
          %345 = sbr.rel (%p343) target = $region40
        $region39: #{tpu_custom_call.1} parent=11 // pred_region
          %347 = vsyncadd [#allocation9], 0
          %s348 = sshll.u32 %s8, 4
          %s349 = int_to_ptr.hbm [resolvable:$true] %s348
          %s350 = sshll.u32 [#allocation10], 4
          %s351 = int_to_ptr.vmem [resolvable:$true] %s350
          %356 = dma.hbm_to_vmem [thread:$0]  %s349, 256, %s351, [#allocation9], 64, 64, 4
        $region40: #{tpu_custom_call.1} parent=11 // pred_fallthru
          _
        // Predicated region
        $region41: #{tpu_custom_call.1} parent=11 // pred_check
          %p357 = pneg %p260
        $region42: #{tpu_custom_call.1} parent=11 // pred_check_branch
          %359 = sbr.rel (%p357) target = $region44
        $region43: #{tpu_custom_call.1} parent=11 // pred_region
          _
        $region44: #{tpu_custom_call.1} parent=11 // pred_fallthru
          _
      $region12: #{tpu_custom_call.1} parent=5 // pred_fallthru
        _
      %p360 = scmp.lt.s32.totalorder %s26, 2
      // Predicated region
      $region45: #{tpu_custom_call.1} parent=5 // pred_check
        %p361 = pneg %p360
      $region46: #{tpu_custom_call.1} parent=5 // pred_check_branch
        %363 = sbr.rel (%p361) target = $region48
      $region47: #{tpu_custom_call.1} parent=5 // pred_region
        // Predicated region
        $region49: #{tpu_custom_call.1} parent=47 // pred_check
          %p364 = pneg %p58
        $region50: #{tpu_custom_call.1} parent=47 // pred_check_branch
          %366 = sbr.rel (%p364) target = $region52
        $region51: #{tpu_custom_call.1} parent=47 // pred_region
          %s367 = sand.u32 %s48, 1
          %s368 = scalar_lea.sflag [#allocation3], %s367
          %s369 = sand.u32 %s48, 1
          %s370 = smul.addr %s369, 8
          %s371 = scalar_lea.vmem [#allocation2], %s370
          %373 = vsyncadd %s368, 0
          %s374 = smul.addr %s33, 8
          %s375 = scalar_lea.hbm %s0, %s374
          %s377 = sshll.u32 %s375, 4
          %s378 = int_to_ptr.hbm [resolvable:$true] %s377
          %s379 = sshll.u32 %s371, 4
          %s380 = int_to_ptr.vmem [resolvable:$true] %s379
          %382 = dma.hbm_to_vmem [thread:$0]  %s378, 128, %s380, %s368
        $region52: #{tpu_custom_call.1} parent=47 // pred_fallthru
          _
        // Predicated region
        $region53: #{tpu_custom_call.1} parent=47 // pred_check
          %p383 = pneg %p86
        $region54: #{tpu_custom_call.1} parent=47 // pred_check_branch
          %385 = sbr.rel (%p383) target = $region56
        $region55: #{tpu_custom_call.1} parent=47 // pred_region
          %s386 = sand.u32 %s26, 1
          %s387 = scalar_lea.sflag [#allocation6], %s386
          %s388 = sand.u32 %s76, 1
          %s389 = smul.addr %s388, 8
          %s390 = scalar_lea.vmem [#allocation5], %s389
          %392 = vsyncadd %s387, 0
          %s393 = sadd.s32 %s34, %s33
          %s394 = smul.addr %s393, 8
          %s395 = scalar_lea.hbm %s1, %s394
          %s397 = sshll.u32 %s395, 4
          %s398 = int_to_ptr.hbm [resolvable:$true] %s397
          %s399 = sshll.u32 %s390, 4
          %s400 = int_to_ptr.vmem [resolvable:$true] %s399
          %402 = dma.hbm_to_vmem [thread:$0]  %s398, 128, %s400, %s387
        $region56: #{tpu_custom_call.1} parent=47 // pred_fallthru
          _
      $region48: #{tpu_custom_call.1} parent=5 // pred_fallthru
        _
      %p403 = scmp.le.s32.totalorder 1, %s26
      %p404 = scmp.lt.s32.totalorder %s26, 3
      %p405 = pnand %p403, %p404
      %p406 = pneg %p405
      // Predicated region
      $region57: #{tpu_custom_call.1} parent=5 // pred_check
        _
      $region58: #{tpu_custom_call.1} parent=5 // pred_check_branch
        %408 = sbr.rel (%p405) target = $region60
      $region59: #{tpu_custom_call.1} parent=5 // pred_region
        %s409 = ssub.s32 %s26, 1
        %s410 = sand.u32 %s51, 1
        %s411 = scalar_lea.sflag [#allocation3], %s410
        %s412 = sand.u32 %s51, 1
        %s413 = smul.addr %s412, 8
        %s414 = scalar_lea.vmem [#allocation2], %s413
        // Predicated region
        $region61: #{tpu_custom_call.1} parent=59 // pred_check
          %p415 = pneg %p64
        $region62: #{tpu_custom_call.1} parent=59 // pred_check_branch
          %417 = sbr.rel (%p415) target = $region64
        $region63: #{tpu_custom_call.1} parent=59 // pred_region
          %419 = dma.done %s411, 128
        $region64: #{tpu_custom_call.1} parent=59 // pred_fallthru
          _
        %s420 = sand.u32 %s31, 1
        %s421 = scalar_lea.sflag [#allocation6], %s420
        %s422 = sand.u32 %s79, 1
        %s423 = smul.addr %s422, 8
        %s424 = scalar_lea.vmem [#allocation5], %s423
        // Predicated region
        $region65: #{tpu_custom_call.1} parent=59 // pred_check
          %p425 = pneg %p92
        $region66: #{tpu_custom_call.1} parent=59 // pred_check_branch
          %427 = sbr.rel (%p425) target = $region68
        $region67: #{tpu_custom_call.1} parent=59 // pred_region
          %429 = dma.done %s421, 128
        $region68: #{tpu_custom_call.1} parent=59 // pred_fallthru
          _
        // Predicated region
        $region69: #{tpu_custom_call.1} parent=59 // pred_check
          %p430 = pneg %p155
        $region70: #{tpu_custom_call.1} parent=59 // pred_check_branch
          %432 = sbr.rel (%p430) target = $region72
        $region71: #{tpu_custom_call.1} parent=59 // pred_region
          %434 = dma.done [#allocation6], 256
        $region72: #{tpu_custom_call.1} parent=59 // pred_fallthru
          _
        // Predicated region
        $region73: #{tpu_custom_call.1} parent=59 // pred_check
          %p435 = pneg %p197
        $region74: #{tpu_custom_call.1} parent=59 // pred_check_branch
          %437 = sbr.rel (%p435) target = $region76
        $region75: #{tpu_custom_call.1} parent=59 // pred_region
          %439 = dma.done [#allocation9], 256
        $region76: #{tpu_custom_call.1} parent=59 // pred_fallthru
          _
        // Predicated region
        $region77: #{tpu_custom_call.1} parent=59 // pred_check
          %p440 = pneg %p239
        $region78: #{tpu_custom_call.1} parent=59 // pred_check_branch
          %442 = sbr.rel (%p440) target = $region80
        $region79: #{tpu_custom_call.1} parent=59 // pred_region
          %444 = dma.done [#allocation9], 256
        $region80: #{tpu_custom_call.1} parent=59 // pred_fallthru
          _
        %s445 = sand.u32 %s51, 1
        %s446 = scalar_lea.sflag [#allocation3], %s445
        %s447 = sand.u32 %s51, 1
        %s448 = smul.addr %s447, 8
        %s449 = scalar_lea.vmem [#allocation2], %s448
        %p450 = pneg %p64
        %p451 = pneg %p61
        %s452 = sand.u32 %s31, 1
        %s453 = scalar_lea.sflag [#allocation6], %s452
        %s454 = sand.u32 %s79, 1
        %s455 = smul.addr %s454, 8
        %s456 = scalar_lea.vmem [#allocation5], %s455
        %p457 = pneg %p92
        %p458 = pneg %p89
        %p459 = pneg %p113
        %p460 = pneg %p110
        %p461 = pneg %p134
        %p462 = pneg %p131
        %p463 = pneg %p155
        %p464 = pneg %p152
        %p465 = pneg %p176
        %p466 = pneg %p173
        %p467 = pneg %p197
        %p468 = pneg %p194
        %p469 = pneg %p218
        %p470 = pneg %p215
        %p471 = pneg %p239
        %p472 = pneg %p236
        %p473 = pneg %p260
        %p474 = pneg %p257
        %p475 = pneg %p288
        %p476 = pneg %p285
        %s477 = sand.u32 %s275, 1
        %s478 = scalar_lea.sflag [#allocation4], %s477
        %s479 = sand.u32 %s275, 1
        %s480 = smul.addr %s479, 8
        %s481 = scalar_lea.vmem [#allocation11], %s480
        %v483 = vld [vmem:[%s414] sm:$0xff]
        %v484 = vld [vmem:[%s424] sm:$0xff]
        %v485 = vld [vmem:[%s2] sm:$0x1]
        %v486 = vld [vmem:[%s3] sm:$0x1]
        %vm487 = vcmask 261120
        %v488 = vsel %vm487, %v483, 0.0
        %489 = vadd.xlane.f32.xlu0 %v488
        %v490 = vpop.xlane.xlu0 %489
        %v491 = vrcp.pop 32.0
        %v492 = vmul.f32 32.0, %v491
        %v493 = vsub.f32 1.0, %v492
        %v494 = vmul.f32 %v491, %v493
        %v495 = vadd.f32 %v491, %v494
        %vm496 = vweird.f32 %v491
        %v497 = vsel %vm496, %v491, %v495
        %v498 = vmul.f32 %v490, %v497
        %v499 = vsub.f32 %v483, %v498
        %v500 = vmul.f32 %v499, %v499
        %v501 = vsel %vm487, %v500, 0.0
        %502 = vadd.xlane.f32.xlu0 %v501
        %v503 = vpop.xlane.xlu0 %502
        %v504 = vmul.f32 %v503, 0.032258064
        %v505 = vrsqrt.pop %v504
        %v506 = vmul.f32 %v505, %v504
        %v507 = vmul.f32 %v506, %v505
        %v508 = vmul.f32 0.5, %v507
        %v509 = vsub.f32 1.5, %v508
        %v510 = vmul.f32 %v505, %v509
        %vm511 = vweird.f32 %v504
        %vm512 = vweird.f32 %v505
        %vm513 = vmor %vm511, %vm512
        %v514 = vsel %vm513, %v505, %v510
        %v515 = vmul.f32 %v499, %v514
        %v517 = vperm.slane %v485, 0
        %v519 = vmul.f32 %v515, %v517
        %v521 = vperm.slane %v486, 0
        %v523 = vadd.f32 %v519, %v521
        %v524 = vpack.c.bf16 %v523, %v523
        %v525 = vsel %vm487, %v484, 0.0
        %526 = vadd.xlane.f32.xlu0 %v525
        %v527 = vpop.xlane.xlu0 %526
        %v528 = vmul.f32 %v527, %v497
        %v529 = vsub.f32 %v484, %v528
        %v530 = vmul.f32 %v529, %v529
        %v531 = vsel %vm487, %v530, 0.0
        %532 = vadd.xlane.f32.xlu0 %v531
        %v533 = vpop.xlane.xlu0 %532
        %v534 = vmul.f32 %v533, 0.032258064
        %v535 = vrsqrt.pop %v534
        %v536 = vmul.f32 %v535, %v534
        %v537 = vmul.f32 %v536, %v535
        %v538 = vmul.f32 0.5, %v537
        %v539 = vsub.f32 1.5, %v538
        %v540 = vmul.f32 %v535, %v539
        %vm541 = vweird.f32 %v534
        %vm542 = vweird.f32 %v535
        %vm543 = vmor %vm541, %vm542
        %v544 = vsel %vm543, %v535, %v540
        %v545 = vmul.f32 %v529, %v544
        %v546 = vmul.f32 %v545, %v517
        %v547 = vadd.f32 %v546, %v521
        %v548 = vpack.c.bf16 %v547, %v547
        %v549 = vld [vmem:[#allocation7] sm:$0xf]
        %v550 = vld [vmem:[#allocation7 + $0x4] sm:$0xf]
        %v551 = vld [vmem:[#allocation7 + $0x8] sm:$0xf]
        %v552 = vld [vmem:[#allocation7 + $0xc] sm:$0xf]
        %v553 = vld [vmem:[%s5] sm:$0x1]
        %v555 = vperm.slane %v553, 0
        %v561 = vunpack.c.l.b16 %v549
        %v562 = vunpack.c.l.b16 %v550
        %v563 = vunpack.c.l.b16 %v551
        %v564 = vunpack.c.l.b16 %v552
        %v565 = vpack.c.b16 %v562, %v561
        %v566 = vpack.c.b16 %v564, %v563
        %v570 = vsel %vm487, %v548, 0
        %572 = vmatpush.bf16.msra.mxu0 0
        %573 = vmatpush.bf16.msra.mxu0 0
        %574 = vmatpush.bf16.msra.mxu0 0
        %575 = vmatpush.bf16.msra.mxu0 0
        %576 = vmatpush.bf16.msra.mxu0 0
        %577 = vmatpush.bf16.msra.mxu0 0
        %578 = vmatpush.bf16.msra.mxu0 %v566
        %579 = vmatpush.bf16.msra.mxu0 %v565
        %580 = vmatmul.bf16.gmra.mxu0 %v570
        %v581 = vpop.f32.mrf.mxu0
        %v582 = vadd.f32 %v555, %v581
        %v583 = vpop.f32.mrf.mxu0
        %584 = vdwg.mxu0
        %v585 = vld [vmem:[#allocation8] sm:$0xf]
        %v586 = vld [vmem:[#allocation8 + $0x4] sm:$0xf]
        %v587 = vld [vmem:[#allocation8 + $0x8] sm:$0xf]
        %v588 = vld [vmem:[#allocation8 + $0xc] sm:$0xf]
        %v589 = vld [vmem:[%s7] sm:$0x1]
        %v591 = vperm.slane %v589, 0
        %v597 = vunpack.c.l.b16 %v585
        %v598 = vunpack.c.l.b16 %v586
        %v599 = vunpack.c.l.b16 %v587
        %v600 = vunpack.c.l.b16 %v588
        %v601 = vpack.c.b16 %v598, %v597
        %v602 = vpack.c.b16 %v600, %v599
        %v606 = vsel %vm487, %v524, 0
        %608 = vmatpush.bf16.msra.mxu0 0
        %609 = vmatpush.bf16.msra.mxu0 0
        %610 = vmatpush.bf16.msra.mxu0 0
        %611 = vmatpush.bf16.msra.mxu0 0
        %612 = vmatpush.bf16.msra.mxu0 0
        %613 = vmatpush.bf16.msra.mxu0 0
        %614 = vmatpush.bf16.msra.mxu0 %v602
        %615 = vmatpush.bf16.msra.mxu0 %v601
        %616 = vmatmul.bf16.gmra.mxu0 %v606
        %v617 = vpop.f32.mrf.mxu0
        %v618 = vadd.f32 %v591, %v617
        %v619 = vpop.f32.mrf.mxu0
        %620 = vdwg.mxu0
        %v621 = vlaneseq
        %v622 = vshrl.u32 %v621, 7
        %s623 = smul.u32 %s36, 8
        %v624 = vstv %s623
        %v625 = vadd.s32 %v622, %v624
        %v626 = vlaneseq
        %v627 = vand.u32 %v626, 127
        %vm628 = vcmp.gt.s32.totalorder %v627, %v625
        %v629 = vpack.c.bf16 %v582, %v582
        %v630 = vpack.c.bf16 %v618, %v618
        %vm631 = vcmask 130048
        %v633 = vsel %vm631, %v629, 0
        %v636 = vsel %vm631, %v630, 0
        %638 = vmatpush.bf16.xpose.msra.mxu0 0
        %639 = vmatpush.bf16.xpose.msra.mxu0 0
        %640 = vmatpush.bf16.xpose.msra.mxu0 0
        %641 = vmatpush.bf16.xpose.msra.mxu0 0
        %642 = vmatpush.bf16.xpose.msra.mxu0 0
        %643 = vmatpush.bf16.xpose.msra.mxu0 0
        %644 = vmatpush.bf16.xpose.msra.mxu0 0
        %645 = vmatpush.bf16.xpose.msra.mxu0 %v636
        %646 = vmatmul.bf16.gmra.mxu0 %v633
        %v647 = vpop.f32.mrf.mxu0
        %v648 = vadd.f32 0.0, %v647
        %v649 = vpop.f32.mrf.mxu0
        %650 = vdwg.mxu0
        %v651 = vmul.f32 %v648, 0.25
        %v652 = vsel %vm628, -100000.0, %v651
        %vm653 = vcmask 64512
        %v654 = vsel %vm653, %v652, -inf
        %655 = vmax.xlane.f32.xlu0 %v654
        %v656 = vpop.xlane.xlu0 %655
        %v657 = vsub.f32 %v652, %v656
        %v658 = vmul.f32 %v657, 1.442695
        %v659 = vpow.pop %v658
        %v660 = vsel %vm653, %v659, 0.0
        %661 = vadd.xlane.f32.xlu0 %v660
        %v662 = vpop.xlane.xlu0 %661
        %v663 = vrcp.pop %v662
        %v664 = vmul.f32 %v659, %v663
        %v665 = vpack.c.bf16 %v664, %v664
        %667 = vrot.lane.b32.xlu0 %v630, 96
        %v668 = vpop.permute.xlu0 %667
        %v670 = vsel %vm653, %v665, 0
        %vm672 = vcmask 1043456
        %v674 = vsel %vm672, %v668, 0
        %676 = vmatpush.bf16.msra.mxu0 0
        %677 = vmatpush.bf16.msra.mxu0 0
        %678 = vmatpush.bf16.msra.mxu0 0
        %679 = vmatpush.bf16.msra.mxu0 0
        %680 = vmatpush.bf16.msra.mxu0 0
        %681 = vmatpush.bf16.msra.mxu0 0
        %682 = vmatpush.bf16.msra.mxu0 0
        %683 = vmatpush.bf16.msra.mxu0 %v674
        %684 = vmatmul.bf16.gmra.mxu0 %v670
        %v685 = vpop.f32.mrf.mxu0
        %v686 = vadd.f32 0.0, %v685
        %v687 = vpop.f32.mrf.mxu0
        %688 = vdwg.mxu0
        %690 = vrot.lane.b32.xlu0 %v629, 112
        %v691 = vpop.permute.xlu0 %690
        %692 = vrot.lane.b32.xlu0 %v630, 112
        %v693 = vpop.permute.xlu0 %692
        %v695 = vsel %vm631, %v691, 0
        %v698 = vsel %vm631, %v693, 0
        %700 = vmatpush.bf16.xpose.msra.mxu0 0
        %701 = vmatpush.bf16.xpose.msra.mxu0 0
        %702 = vmatpush.bf16.xpose.msra.mxu0 0
        %703 = vmatpush.bf16.xpose.msra.mxu0 0
        %704 = vmatpush.bf16.xpose.msra.mxu0 0
        %705 = vmatpush.bf16.xpose.msra.mxu0 0
        %706 = vmatpush.bf16.xpose.msra.mxu0 0
        %707 = vmatpush.bf16.xpose.msra.mxu0 %v698
        %708 = vmatmul.bf16.gmra.mxu0 %v695
        %v709 = vpop.f32.mrf.mxu0
        %v710 = vadd.f32 0.0, %v709
        %v711 = vpop.f32.mrf.mxu0
        %712 = vdwg.mxu0
        %v713 = vmul.f32 %v710, 0.25
        %v714 = vsel %vm628, -100000.0, %v713
        %v715 = vsel %vm653, %v714, -inf
        %716 = vmax.xlane.f32.xlu0 %v715
        %v717 = vpop.xlane.xlu0 %716
        %v718 = vsub.f32 %v714, %v717
        %v719 = vmul.f32 %v718, 1.442695
        %v720 = vpow.pop %v719
        %v721 = vsel %vm653, %v720, 0.0
        %722 = vadd.xlane.f32.xlu0 %v721
        %v723 = vpop.xlane.xlu0 %722
        %v724 = vrcp.pop %v723
        %v725 = vmul.f32 %v720, %v724
        %v726 = vpack.c.bf16 %v725, %v725
        %727 = vrot.lane.b32.xlu0 %v630, 80
        %v728 = vpop.permute.xlu0 %727
        %v730 = vsel %vm653, %v726, 0
        %v733 = vsel %vm672, %v728, 0
        %735 = vmatpush.bf16.msra.mxu0 0
        %736 = vmatpush.bf16.msra.mxu0 0
        %737 = vmatpush.bf16.msra.mxu0 0
        %738 = vmatpush.bf16.msra.mxu0 0
        %739 = vmatpush.bf16.msra.mxu0 0
        %740 = vmatpush.bf16.msra.mxu0 0
        %741 = vmatpush.bf16.msra.mxu0 0
        %742 = vmatpush.bf16.msra.mxu0 %v733
        %743 = vmatmul.bf16.gmra.mxu0 %v730
        %v744 = vpop.f32.mrf.mxu0
        %v745 = vadd.f32 0.0, %v744
        %v746 = vpop.f32.mrf.mxu0
        %747 = vdwg.mxu0
        %749 = vrot.lane.b32.xlu0 %v745, 16
        %v750 = vpop.permute.xlu0 %749
        %v752 = vsel %vm631, %v686, %v750
        %v753 = vpack.c.bf16 %v752, %v752
        %v754 = vld [vmem:[#allocation10] sm:$0xf]
        %v755 = vld [vmem:[#allocation10 + $0x4] sm:$0xf]
        %v756 = vld [vmem:[#allocation10 + $0x8] sm:$0xf]
        %v757 = vld [vmem:[#allocation10 + $0xc] sm:$0xf]
        %v758 = vld [vmem:[%s9] sm:$0x1]
        %v760 = vperm.slane %v758, 0
        %v766 = vunpack.c.l.b16 %v754
        %v767 = vunpack.c.l.b16 %v755
        %v768 = vunpack.c.l.b16 %v756
        %v769 = vunpack.c.l.b16 %v757
        %v770 = vpack.c.b16 %v767, %v766
        %v771 = vpack.c.b16 %v769, %v768
        %v775 = vsel %vm487, %v753, 0
        %777 = vmatpush.bf16.msra.mxu0 0
        %778 = vmatpush.bf16.msra.mxu0 0
        %779 = vmatpush.bf16.msra.mxu0 0
        %780 = vmatpush.bf16.msra.mxu0 0
        %781 = vmatpush.bf16.msra.mxu0 0
        %782 = vmatpush.bf16.msra.mxu0 0
        %783 = vmatpush.bf16.msra.mxu0 %v771
        %784 = vmatpush.bf16.msra.mxu0 %v770
        %785 = vmatmul.bf16.gmra.mxu0 %v775
        %v786 = vpop.f32.mrf.mxu0
        %v787 = vadd.f32 %v760, %v786
        %v788 = vpop.f32.mrf.mxu0
        %789 = vdwg.mxu0
        %v790 = vadd.f32 %v484, %v787
        %791 = vst.msk [vmem:[%s481] sm:$0xff] %vm487, %v790
        %s792 = sand.u32 %s275, 1
        %s793 = scalar_lea.sflag [#allocation4], %s792
        %s794 = sand.u32 %s275, 1
        %s795 = smul.addr %s794, 8
        %s796 = scalar_lea.vmem [#allocation11], %s795
        // Predicated region
        $region81: #{tpu_custom_call.1} parent=59 // pred_check
          %p797 = pneg %p285
        $region82: #{tpu_custom_call.1} parent=59 // pred_check_branch
          %799 = sbr.rel (%p797) target = $region84
        $region83: #{tpu_custom_call.1} parent=59 // pred_region
          %801 = vsyncadd %s793, 0
          %s802 = sadd.s32 %s36, %s35
          %s803 = smul.addr %s802, 8
          %s804 = scalar_lea.hbm %s10, %s803
          %s806 = sshll.u32 %s796, 4
          %s807 = int_to_ptr.vmem [resolvable:$true] %s806
          %s808 = sshll.u32 %s804, 4
          %s809 = int_to_ptr.hbm [resolvable:$true] %s808
          %811 = dma.vmem_to_hbm [thread:$0]  %s807, 128, %s809, %s793
        $region84: #{tpu_custom_call.1} parent=59 // pred_fallthru
          _
      $region60: #{tpu_custom_call.1} parent=5 // pred_fallthru
        _
      %p812 = scmp.le.s32.totalorder 2, %s26
      // Predicated region
      $region85: #{tpu_custom_call.1} parent=5 // pred_check
        %p813 = pneg %p812
      $region86: #{tpu_custom_call.1} parent=5 // pred_check_branch
        %815 = sbr.rel (%p813) target = $region88
      $region87: #{tpu_custom_call.1} parent=5 // pred_region
        %s816 = ssub.s32 %s26, 2
        // Predicated region
        $region89: #{tpu_custom_call.1} parent=87 // pred_check
          %p817 = pneg %p291
        $region90: #{tpu_custom_call.1} parent=87 // pred_check_branch
          %819 = sbr.rel (%p817) target = $region92
        $region91: #{tpu_custom_call.1} parent=87 // pred_region
          %s820 = sand.u32 %s276, 1
          %s821 = scalar_lea.sflag [#allocation4], %s820
          %s822 = sand.u32 %s276, 1
          %s823 = smul.addr %s822, 8
          %s824 = scalar_lea.vmem [#allocation11], %s823
          %826 = dma.done %s821, 128
        $region92: #{tpu_custom_call.1} parent=87 // pred_fallthru
          _
      $region88: #{tpu_custom_call.1} parent=5 // pred_fallthru
        _
    $region6: #{tpu_custom_call.1} parent=1 // loop_footer
      %s30 = sadd.s32 1, %s26
    $region7: #{tpu_custom_call.1} parent=1 // loop_footer_branch
      %25 = sbr.rel target = $region3
    $region8: #{tpu_custom_call.1} parent=1 // loop_exit
      _
    %827 = vsyncpa [#allocation3], 1
    %s828 = scalar_lea.sflag [#allocation3], 1
    %829 = vsyncpa %s828, 1
    %830 = vsyncpa [#allocation6], 1
    %s831 = scalar_lea.sflag [#allocation6], 1
    %832 = vsyncpa %s831, 1
    %833 = vsyncpa [#allocation9], 1
    %834 = vsyncpa [#allocation4], 1
    %s835 = scalar_lea.sflag [#allocation4], 1
    %836 = vsyncpa %s835, 1

</llo_original>
